<compile_context>
chip_gen: v7x
topology: tpu7x:2x2x1
jax: 0.10.0
libtpu: 0.0.40
codegen_flags: <defaults>
</compile_context>

<pallas_src>
import functools

import jax
import jax.numpy as jnp
from jax.experimental import pallas as pl
from jax.experimental.pallas import tpu as pltpu


def _round_up(x, m):
    return ((x + m - 1) // m) * m


def _vmem_capacity_bytes():
    try:
        return int(pltpu.get_tpu_info().vmem_capacity_bytes)
    except Exception:
        return 64 << 20   # conservative: v7x per-TensorCore VMEM


def autoencoder_kernel(hp, lp, dp,
                       x_ref, w1_ref, w2_ref, w3_ref, w4_ref, b_ref, out_ref):
    # Packed biases: [b1 (hp) | b2 (lp) | b3 (hp) | b4 (dp)] on the lane axis;
    # all offsets are multiples of 128 -> free static lane slices.
    o2 = hp
    o3 = hp + lp
    o4 = hp + lp + hp
    b1 = b_ref[:, 0:hp]
    b2 = b_ref[:, o2:o2 + lp]
    b3 = b_ref[:, o3:o3 + hp]
    b4 = b_ref[:, o4:o4 + dp]

    x = x_ref[...]                                              # (TB, Dp) bf16

    # encoder Linear1 (gate^2 and BatchNorm1 pre-folded into w1/b1) -> ReLU
    h = jnp.dot(x, w1_ref[...], preferred_element_type=jnp.float32) + b1
    h = jnp.maximum(h, 0.0)                                     # fp32 VPU ReLU
    # encoder Linear2 (batch_norm2 pre-folded into w2/b2)
    z = jnp.dot(h.astype(jnp.bfloat16), w2_ref[...],
                preferred_element_type=jnp.float32) + b2
    # decoder Linear3 -> ReLU
    d = jnp.dot(z.astype(jnp.bfloat16), w3_ref[...],
                preferred_element_type=jnp.float32) + b3
    d = jnp.maximum(d, 0.0)
    # decoder Linear4 -> lane-dense (TB, Dp) fp32 store
    out_ref[...] = jnp.dot(d.astype(jnp.bfloat16), w4_ref[...],
                           preferred_element_type=jnp.float32) + b4


def fold_and_pad_params(params, input_dim, latent_dim):
    """One-time host-side prep: fold eval-mode constants, pad to 128-multiples,
    cast weights to bf16, pack biases into one lane-major array."""
    D, L = input_dim, latent_dim
    H = 10 * D
    Dp, Lp, Hp = _round_up(D, 128), _round_up(L, 128), _round_up(H, 128)

    # FeatureSelector eval gate, applied twice in forward()
    gate = jnp.clip(params["mu"][0] + 0.5, 0.0, 1.0)            # (D,)
    g2 = gate * gate

    # Fold gate^2 (input rows) and BatchNorm1 affine (output cols) into w1/b1.
    w1 = (g2[:, None] * params["w1"]) * params["bn1_scale"]     # (D, H)
    b1 = params["b1"] * params["bn1_scale"] + params["bn1_shift"]
    # Fold batch_norm2 affine into w2/b2.
    w2 = params["w2"] * params["bn2_scale"]                     # (H, L)
    b2 = params["b2"] * params["bn2_scale"] + params["bn2_shift"]
    w3, b3 = params["w3"], params["b3"]                         # (L, H)
    w4, b4 = params["w4"], params["b4"]                         # (H, D)

    def pad2(a, r, c):
        return jnp.pad(a, ((0, r - a.shape[0]), (0, c - a.shape[1])))

    w1p = pad2(w1, Dp, Hp).astype(jnp.bfloat16)
    w2p = pad2(w2, Hp, Lp).astype(jnp.bfloat16)
    w3p = pad2(w3, Lp, Hp).astype(jnp.bfloat16)
    w4p = pad2(w4, Hp, Dp).astype(jnp.bfloat16)
    biases = jnp.concatenate(
        [pad2(b1, 1, Hp), pad2(b2, 1, Lp), pad2(b3, 1, Hp), pad2(b4, 1, Dp)],
        axis=1).astype(jnp.float32)                             # (1, 2*Hp+Lp+Dp)

    return (w1p, w2p, w3p, w4p, biases), (Dp, Lp, Hp)


def _weight_vmem_bytes(Dp, Lp, Hp, bias_lanes):
    # single-buffered bf16 weights + single-buffered fp32 packed biases
    return 2 * (Dp * Hp + Hp * Lp + Lp * Hp + Hp * Dp) + 4 * bias_lanes


def _per_tile_vmem_bytes(tb, Dp, Lp, Hp):
    io = 2 * 2 * tb * Dp + 2 * 4 * tb * Dp          # bf16 in + fp32 out, 2x buffered
    act = (4 + 2) * tb * (2 * Hp + Lp)              # fp32 activations + bf16 casts
    return io + act


def _choose_batch_tile(B, Dp, Lp, Hp, bias_lanes, vmem_cap):
    fixed = _weight_vmem_bytes(Dp, Lp, Hp, bias_lanes)
    headroom = 8 << 20

    def fits(tb):
        return fixed + _per_tile_vmem_bytes(tb, Dp, Lp, Hp) + headroom <= vmem_cap

    Bmin = _round_up(B, 8)
    tb = 8
    for cand in (1024, 512, 256, 128, 64, 32, 16, 8):
        if fits(cand):
            tb = cand
            break
    tb = min(tb, Bmin)
    # v7x megacore: guarantee >= 2 grid steps when the batch allows it so the
    # "parallel" axis shards across both TensorCores (no-op on v5e/v6e).
    if Bmin >= 16 and Bmin <= tb:
        tb = _round_up((Bmin + 1) // 2, 8)
    return tb


def _pallas_forward(x_p, w1, w2, w3, w4, biases, *, TB, Dp, Lp, Hp, vmem_limit):
    Bp = x_p.shape[0]
    Btot = biases.shape[1]

    def resident(shape):
        # constant index_map + single buffering: fetched once, stays in VMEM
        return pl.BlockSpec(shape, lambda i: (0, 0),
                            pipeline_mode=pl.Buffered(1))

    in_specs = [
        pl.BlockSpec((TB, Dp), lambda i: (i, 0)),   # x tile (double-buffered)
        resident((Dp, Hp)),                         # w1
        resident((Hp, Lp)),                         # w2
        resident((Lp, Hp)),                         # w3
        resident((Hp, Dp)),                         # w4
        resident((1, Btot)),                        # packed biases
    ]
    out_specs = pl.BlockSpec((TB, Dp), lambda i: (i, 0))

    flops = 2 * Bp * (Dp * Hp + Hp * Lp + Lp * Hp + Hp * Dp)
    bytes_accessed = (2 * (Dp * Hp + Hp * Lp + Lp * Hp + Hp * Dp)   # bf16 weights
                      + 4 * Btot                                    # fp32 biases
                      + 2 * Bp * Dp                                 # bf16 x
                      + 4 * Bp * Dp)                                # fp32 out

    return pl.pallas_call(
        functools.partial(autoencoder_kernel, Hp, Lp, Dp),
        out_shape=jax.ShapeDtypeStruct((Bp, Dp), jnp.float32),
        grid=(Bp // TB,),
        in_specs=in_specs,
        out_specs=out_specs,
        compiler_params=pltpu.CompilerParams(
            dimension_semantics=("parallel",),
            vmem_limit_bytes=vmem_limit),
        cost_estimate=pl.CostEstimate(
            flops=flops, transcendentals=0, bytes_accessed=bytes_accessed),
    )(x_p, w1, w2, w3, w4, biases)


def make_autoencoder_forward(params, input_dim, latent_dim):
    """Folds/pads/casts the parameters ONCE and returns a jitted forward(x)."""
    (w1, w2, w3, w4, biases), (Dp, Lp, Hp) = fold_and_pad_params(
        params, input_dim, latent_dim)
    w1, w2, w3, w4, biases = (jax.block_until_ready(a)
                              for a in (w1, w2, w3, w4, biases))
    vmem_cap = _vmem_capacity_bytes()
    D = input_dim
    bias_lanes = biases.shape[1]

    @jax.jit
    def forward(x):
        B = x.shape[0]
        TB = _choose_batch_tile(B, Dp, Lp, Hp, bias_lanes, vmem_cap)
        Bp = _round_up(B, TB)
        # stream x as bf16 (accuracy already bounded by bf16 MXU inputs)
        x_p = jnp.pad(x.astype(jnp.bfloat16), ((0, Bp - B), (0, Dp - D)))

        needed = (_weight_vmem_bytes(Dp, Lp, Hp, bias_lanes)
                  + _per_tile_vmem_bytes(TB, Dp, Lp, Hp))
        vmem_limit = int(min(max(needed + (8 << 20), 32 << 20),
                             vmem_cap - (4 << 20)))

        out_p = _pallas_forward(x_p, w1, w2, w3, w4, biases,
                                TB=TB, Dp=Dp, Lp=Lp, Hp=Hp,
                                vmem_limit=vmem_limit)
        # lane-dense store in the kernel; only a slice here (no reshape/transpose)
        return out_p[:B, :D]

    return forward


def make_params(key, input_dim, latent_dim):
    hidden = input_dim * 10
    ks = jax.random.split(key, 10)
    eps = 1e-5

    def lin(kw, kb, fan_in, fan_out):
        # deterministic synthetic init (shapes match nn.Linear, pre-transposed)
        w = (jax.random.normal(kw, (fan_in, fan_out), jnp.float32)
             / jnp.sqrt(jnp.float32(fan_in)))
        b = 0.01 * jax.random.normal(kb, (1, fan_out), jnp.float32)
        return w, b

    mu = 0.01 * jax.random.normal(ks[0], (1, input_dim), jnp.float32)
    w1, b1 = lin(ks[1], ks[2], input_dim, hidden)
    w2, b2 = lin(ks[3], ks[4], hidden, latent_dim)
    w3, b3 = lin(ks[5], ks[6], latent_dim, hidden)
    w4, b4 = lin(ks[7], ks[8], hidden, input_dim)

    # BatchNorm at init: gamma=1, beta=0, running_mean=0, running_var=1
    # eval-mode affine:  y = x * scale + shift,  scale = gamma/sqrt(var+eps)
    bn1_scale = jnp.full((1, hidden), 1.0 / jnp.sqrt(1.0 + eps), jnp.float32)
    bn1_shift = jnp.zeros((1, hidden), jnp.float32)
    bn2_scale = jnp.full((1, latent_dim), 1.0 / jnp.sqrt(1.0 + eps), jnp.float32)
    bn2_shift = jnp.zeros((1, latent_dim), jnp.float32)

    return dict(mu=mu, w1=w1, b1=b1, bn1_scale=bn1_scale, bn1_shift=bn1_shift,
                w2=w2, b2=b2, bn2_scale=bn2_scale, bn2_shift=bn2_shift,
                w3=w3, b3=b3, w4=w4, b4=b4)


def reference_forward(x, p):
    # Pure-JAX fp32 reference of the original (unfolded) eval-mode forward.
    gate = jnp.clip(p["mu"] + 0.5, 0.0, 1.0)
    h = x * gate * gate                       # FeatureSelector applied twice
    h = h @ p["w1"] + p["b1"]
    h = h * p["bn1_scale"] + p["bn1_shift"]
    h = jnp.maximum(h, 0.0)
    z = h @ p["w2"] + p["b2"]
    z = z * p["bn2_scale"] + p["bn2_shift"]
    d = jnp.maximum(z @ p["w3"] + p["b3"], 0.0)
    return d @ p["w4"] + p["b4"]


if __name__ == "__main__":
    B, D, L = 8, 16, 8            # batch, input_dim, latent_dim (hidden = 160)
    key = jax.random.PRNGKey(0)
    kx, kp = jax.random.split(key)
    x = jax.random.normal(kx, (B, D), jnp.float32)
    params = make_params(kp, D, L)

    forward = make_autoencoder_forward(params, input_dim=D, latent_dim=L)
    out = forward(x)
    out = jax.block_until_ready(out)

    ref = reference_forward(x, params)
    assert out.shape == (B, D)
    # bf16 MXU inputs -> compare against the fp32 reference with bf16 tolerance
    assert jnp.allclose(out, ref, atol=5e-2, rtol=5e-2), \
        float(jnp.max(jnp.abs(out - ref)))
    print("KERNEL_OK")
</pallas_src>

<mosaic_0001>
module attributes {stable_mosaic.version = 11 : i64} {
  func.func @autoencoder_kernel(%arg0: i32, %arg1: memref<8x128xbf16, #tpu.memory_space<vmem>>, %arg2: memref<128x256xbf16, #tpu.memory_space<vmem>>, %arg3: memref<256x128xbf16, #tpu.memory_space<vmem>>, %arg4: memref<128x256xbf16, #tpu.memory_space<vmem>>, %arg5: memref<256x128xbf16, #tpu.memory_space<vmem>>, %arg6: memref<1x768xf32, #tpu.memory_space<vmem>>, %arg7: memref<8x128xf32, #tpu.memory_space<vmem>>) attributes {dimension_semantics = [#tpu.dimension_semantics<parallel>], iteration_bounds = array<i64: 1>, scalar_prefetch = 0 : i64, scratch_operands = 0 : i64, tpu.core_type = #tpu.core_type<tc>, window_params = [{transform_indices = @transform_0, window_bounds = array<i64: 8, 128>}, {pipeline_mode = #tpu.pipeline_mode<synchronous>, transform_indices = @transform_1, window_bounds = array<i64: 128, 256>}, {pipeline_mode = #tpu.pipeline_mode<synchronous>, transform_indices = @transform_2, window_bounds = array<i64: 256, 128>}, {pipeline_mode = #tpu.pipeline_mode<synchronous>, transform_indices = @transform_3, window_bounds = array<i64: 128, 256>}, {pipeline_mode = #tpu.pipeline_mode<synchronous>, transform_indices = @transform_4, window_bounds = array<i64: 256, 128>}, {pipeline_mode = #tpu.pipeline_mode<synchronous>, transform_indices = @transform_5, window_bounds = array<i64: 1, 768>}, {transform_indices = @transform_6, window_bounds = array<i64: 8, 128>}]} {
    %c0 = arith.constant 0 : index
    %c0_0 = arith.constant 0 : index
    %0 = vector.load %arg6[%c0, %c0_0] : memref<1x768xf32, #tpu.memory_space<vmem>>, vector<1x256xf32>
    %c0_1 = arith.constant 0 : index
    %c256 = arith.constant 256 : index
    %1 = vector.load %arg6[%c0_1, %c256] : memref<1x768xf32, #tpu.memory_space<vmem>>, vector<1x128xf32>
    %c0_2 = arith.constant 0 : index
    %c384 = arith.constant 384 : index
    %2 = vector.load %arg6[%c0_2, %c384] : memref<1x768xf32, #tpu.memory_space<vmem>>, vector<1x256xf32>
    %c0_3 = arith.constant 0 : index
    %c640 = arith.constant 640 : index
    %3 = vector.load %arg6[%c0_3, %c640] : memref<1x768xf32, #tpu.memory_space<vmem>>, vector<1x128xf32>
    %c0_4 = arith.constant 0 : index
    %c0_5 = arith.constant 0 : index
    %4 = vector.load %arg1[%c0_4, %c0_5] : memref<8x128xbf16, #tpu.memory_space<vmem>>, vector<8x128xbf16>
    %c0_6 = arith.constant 0 : index
    %c0_7 = arith.constant 0 : index
    %5 = vector.load %arg2[%c0_6, %c0_7] : memref<128x256xbf16, #tpu.memory_space<vmem>>, vector<128x256xbf16>
    %cst = arith.constant dense<0.000000e+00> : vector<8x256xf32>
    %6 = tpu.matmul %4, %5, %cst {dimension_numbers = #tpu.dot_dimension_numbers<[1], [0], [0], [1], [0, 0, 1, 1], [], []>} : vector<8x128xbf16>, vector<128x256xbf16>, vector<8x256xf32> -> vector<8x256xf32>
    %7 = vector.broadcast %0 : vector<1x256xf32> to vector<8x256xf32>
    %8 = arith.addf %6, %7 : vector<8x256xf32>
    %cst_8 = arith.constant 0.000000e+00 : f32
    %9 = vector.broadcast %cst_8 : f32 to vector<8x256xf32>
    %10 = arith.maximumf %8, %9 : vector<8x256xf32>
    %11 = arith.truncf %10 : vector<8x256xf32> to vector<8x256xbf16>
    %c0_9 = arith.constant 0 : index
    %c0_10 = arith.constant 0 : index
    %12 = vector.load %arg3[%c0_9, %c0_10] : memref<256x128xbf16, #tpu.memory_space<vmem>>, vector<256x128xbf16>
    %cst_11 = arith.constant dense<0.000000e+00> : vector<8x128xf32>
    %13 = tpu.matmul %11, %12, %cst_11 {dimension_numbers = #tpu.dot_dimension_numbers<[1], [0], [0], [1], [0, 0, 1, 1], [], []>} : vector<8x256xbf16>, vector<256x128xbf16>, vector<8x128xf32> -> vector<8x128xf32>
    %14 = vector.broadcast %1 : vector<1x128xf32> to vector<8x128xf32>
    %15 = arith.addf %13, %14 : vector<8x128xf32>
    %16 = arith.truncf %15 : vector<8x128xf32> to vector<8x128xbf16>
    %c0_12 = arith.constant 0 : index
    %c0_13 = arith.constant 0 : index
    %17 = vector.load %arg4[%c0_12, %c0_13] : memref<128x256xbf16, #tpu.memory_space<vmem>>, vector<128x256xbf16>
    %cst_14 = arith.constant dense<0.000000e+00> : vector<8x256xf32>
    %18 = tpu.matmul %16, %17, %cst_14 {dimension_numbers = #tpu.dot_dimension_numbers<[1], [0], [0], [1], [0, 0, 1, 1], [], []>} : vector<8x128xbf16>, vector<128x256xbf16>, vector<8x256xf32> -> vector<8x256xf32>
    %19 = vector.broadcast %2 : vector<1x256xf32> to vector<8x256xf32>
    %20 = arith.addf %18, %19 : vector<8x256xf32>
    %cst_15 = arith.constant 0.000000e+00 : f32
    %21 = vector.broadcast %cst_15 : f32 to vector<8x256xf32>
    %22 = arith.maximumf %20, %21 : vector<8x256xf32>
    %23 = arith.truncf %22 : vector<8x256xf32> to vector<8x256xbf16>
    %c0_16 = arith.constant 0 : index
    %c0_17 = arith.constant 0 : index
    %24 = vector.load %arg5[%c0_16, %c0_17] : memref<256x128xbf16, #tpu.memory_space<vmem>>, vector<256x128xbf16>
    %cst_18 = arith.constant dense<0.000000e+00> : vector<8x128xf32>
    %25 = tpu.matmul %23, %24, %cst_18 {dimension_numbers = #tpu.dot_dimension_numbers<[1], [0], [0], [1], [0, 0, 1, 1], [], []>} : vector<8x256xbf16>, vector<256x128xbf16>, vector<8x128xf32> -> vector<8x128xf32>
    %26 = vector.broadcast %3 : vector<1x128xf32> to vector<8x128xf32>
    %27 = arith.addf %25, %26 : vector<8x128xf32>
    %c0_19 = arith.constant 0 : index
    %c0_20 = arith.constant 0 : index
    %28 = vector.load %arg7[%c0_19, %c0_20] : memref<8x128xf32, #tpu.memory_space<vmem>>, vector<8x128xf32>
    tpu.vector_store %arg7[%c0_19, %c0_20], %27 {strides = array<i32>} : memref<8x128xf32, #tpu.memory_space<vmem>>, vector<8x128xf32>,
    return
  }
  func.func @transform_0(%arg0: i32) -> (i32, i32) {
    %c0_i32 = arith.constant 0 : i32
    %c0_i32_0 = arith.constant 0 : i32
    return %arg0, %c0_i32 : i32, i32
  }
  func.func @transform_1(%arg0: i32) -> (i32, i32) {
    %c0_i32 = arith.constant 0 : i32
    %c0_i32_0 = arith.constant 0 : i32
    %c0_i32_1 = arith.constant 0 : i32
    return %c0_i32, %c0_i32_0 : i32, i32
  }
  func.func @transform_2(%arg0: i32) -> (i32, i32) {
    %c0_i32 = arith.constant 0 : i32
    %c0_i32_0 = arith.constant 0 : i32
    %c0_i32_1 = arith.constant 0 : i32
    return %c0_i32, %c0_i32_0 : i32, i32
  }
  func.func @transform_3(%arg0: i32) -> (i32, i32) {
    %c0_i32 = arith.constant 0 : i32
    %c0_i32_0 = arith.constant 0 : i32
    %c0_i32_1 = arith.constant 0 : i32
    return %c0_i32, %c0_i32_0 : i32, i32
  }
  func.func @transform_4(%arg0: i32) -> (i32, i32) {
    %c0_i32 = arith.constant 0 : i32
    %c0_i32_0 = arith.constant 0 : i32
    %c0_i32_1 = arith.constant 0 : i32
    return %c0_i32, %c0_i32_0 : i32, i32
  }
  func.func @transform_5(%arg0: i32) -> (i32, i32) {
    %c0_i32 = arith.constant 0 : i32
    %c0_i32_0 = arith.constant 0 : i32
    %c0_i32_1 = arith.constant 0 : i32
    return %c0_i32, %c0_i32_0 : i32, i32
  }
  func.func @transform_6(%arg0: i32) -> (i32, i32) {
    %c0_i32 = arith.constant 0 : i32
    %c0_i32_0 = arith.constant 0 : i32
    return %arg0, %c0_i32 : i32, i32
  }
}

</mosaic_0001>

<llo_original>
// kernel: forward.1
$region0: #{forward.1}
  #allocation0 [shape = 'u32[]', space=smem, size = 0x4, offset = 0x4, fixed_abs, tag = 'smem constant byte address 0x4 - core index']
  #allocation1 [shape = 'u32[144,128]{1,0:T(1,128)}', space=vmem, size = 0x12000, scoped, tag = 'internal scratch']
  %s0 = inlined_call_operand.vmem [shape: bf16[8,128], index: 0, kind: input, shape index: {}]
  %s1 = inlined_call_operand.vmem [shape: bf16[128,256], index: 1, kind: input, shape index: {}]
  %s2 = inlined_call_operand.vmem [shape: bf16[256,128], index: 2, kind: input, shape index: {}]
  %s3 = inlined_call_operand.vmem [shape: bf16[128,256], index: 3, kind: input, shape index: {}]
  %s4 = inlined_call_operand.vmem [shape: bf16[256,128], index: 4, kind: input, shape index: {}]
  %s5 = inlined_call_operand.vmem [shape: f32[1,768], index: 5, kind: input, shape index: {}]
  %s6 = inlined_call_operand.hbm [shape: f32[8,128], index: 6, kind: output, shape index: {}]
  %s7 = sld [smem:[#allocation0]]
  $region34: #{forward.1} parent=0
    _
  %s9 = ssub.s32 1, %s7
  %s10 = scalar_select 0, %s9, %s7
  $region1: #{forward.1} parent=0
    #allocation2 [shape = 'u8[4096]{0}', space=vmem, size = 0x1000, scoped, tag = 'output window, operand 0, single buffered']
    #allocation3 [shape = 's32[1]{0}', space=sflag, size = 0x4, scoped, tag = 'scoped memory for forward.1']
    %11 = vsyncpa [#allocation3], 0
    // Predicated region
    $region2: #{forward.1} parent=1 // pred_check
      _
    $region3: #{forward.1} parent=1 // pred_check_branch
      %13 = sbr.rel (0) target = $region5
    $region4: #{forward.1} parent=1 // pred_region
      _
    $region5: #{forward.1} parent=1 // pred_fallthru
      _
    // Predicated region
    $region6: #{forward.1} parent=1 // pred_check
      _
    $region7: #{forward.1} parent=1 // pred_check_branch
      %15 = sbr.rel (0) target = $region9
    $region8: #{forward.1} parent=1 // pred_region
      _
    $region9: #{forward.1} parent=1 // pred_fallthru
      _
    // Predicated region
    $region10: #{forward.1} parent=1 // pred_check
      _
    $region11: #{forward.1} parent=1 // pred_check_branch
      %17 = sbr.rel (0) target = $region13
    $region12: #{forward.1} parent=1 // pred_region
      _
    $region13: #{forward.1} parent=1 // pred_fallthru
      _
    // Predicated region
    $region14: #{forward.1} parent=1 // pred_check
      _
    $region15: #{forward.1} parent=1 // pred_check_branch
      %19 = sbr.rel (0) target = $region17
    $region16: #{forward.1} parent=1 // pred_region
      _
    $region17: #{forward.1} parent=1 // pred_fallthru
      _
    // Predicated region
    $region18: #{forward.1} parent=1 // pred_check
      _
    $region19: #{forward.1} parent=1 // pred_check_branch
      %21 = sbr.rel (0) target = $region21
    $region20: #{forward.1} parent=1 // pred_region
      _
    $region21: #{forward.1} parent=1 // pred_fallthru
      _
    // Predicated region
    $region22: #{forward.1} parent=1 // pred_check
      _
    $region23: #{forward.1} parent=1 // pred_check_branch
      %23 = sbr.rel (0) target = $region25
    $region24: #{forward.1} parent=1 // pred_region
      _
    $region25: #{forward.1} parent=1 // pred_fallthru
      _
    %v25 = vld [vmem:[%s5] sm:$0x3]
    %v26 = vld [vmem:[%s5 + $0x2] sm:$0x1]
    %v27 = vld [vmem:[%s5 + $0x3] sm:$0x3]
    %v28 = vld [vmem:[%s5 + $0x5] sm:$0x1]
    %v29 = vld [vmem:[%s0] sm:$0xf]
    %v30 = vld [vmem:[%s1] sm:$0xff]
    %v31 = vld [vmem:[%s1 + $0x8] sm:$0xff]
    %v32 = vld [vmem:[%s1 + $0x10] sm:$0xff]
    %v33 = vld [vmem:[%s1 + $0x18] sm:$0xff]
    %v34 = vld [vmem:[%s1 + $0x20] sm:$0xff]
    %v35 = vld [vmem:[%s1 + $0x28] sm:$0xff]
    %v36 = vld [vmem:[%s1 + $0x30] sm:$0xff]
    %v37 = vld [vmem:[%s1 + $0x38] sm:$0xff]
    %v38 = vld [vmem:[%s1 + $0x40] sm:$0xff]
    %v39 = vld [vmem:[%s1 + $0x48] sm:$0xff]
    %v40 = vld [vmem:[%s1 + $0x50] sm:$0xff]
    %v41 = vld [vmem:[%s1 + $0x58] sm:$0xff]
    %v42 = vld [vmem:[%s1 + $0x60] sm:$0xff]
    %v43 = vld [vmem:[%s1 + $0x68] sm:$0xff]
    %v44 = vld [vmem:[%s1 + $0x70] sm:$0xff]
    %v45 = vld [vmem:[%s1 + $0x78] sm:$0xff]
    %v47 = vlaneseq
    %v48 = vshrl.u32 %v47, 7
    %v49 = vsub.s32 0, %v48
    %v50 = vrot.slane %v25, %v49
    %v51 = vlaneseq
    %v52 = vshrl.u32 %v51, 7
    %v53 = vsub.s32 1, %v52
    %v54 = vrot.slane %v25, %v53
    %v73 = vunpack.c.l.b16 %v30
    %v74 = vunpack.c.h.b16 %v30
    %v75 = vunpack.c.l.b16 %v31
    %v76 = vunpack.c.h.b16 %v31
    %v77 = vunpack.c.l.b16 %v32
    %v78 = vunpack.c.h.b16 %v32
    %v79 = vunpack.c.l.b16 %v33
    %v80 = vunpack.c.h.b16 %v33
    %v81 = vunpack.c.l.b16 %v34
    %v82 = vunpack.c.h.b16 %v34
    %v83 = vunpack.c.l.b16 %v35
    %v84 = vunpack.c.h.b16 %v35
    %v85 = vunpack.c.l.b16 %v36
    %v86 = vunpack.c.h.b16 %v36
    %v87 = vunpack.c.l.b16 %v37
    %v88 = vunpack.c.h.b16 %v37
    %v89 = vunpack.c.l.b16 %v38
    %v90 = vunpack.c.h.b16 %v38
    %v91 = vunpack.c.l.b16 %v39
    %v92 = vunpack.c.h.b16 %v39
    %v93 = vunpack.c.l.b16 %v40
    %v94 = vunpack.c.h.b16 %v40
    %v95 = vunpack.c.l.b16 %v41
    %v96 = vunpack.c.h.b16 %v41
    %v97 = vunpack.c.l.b16 %v42
    %v98 = vunpack.c.h.b16 %v42
    %v99 = vunpack.c.l.b16 %v43
    %v100 = vunpack.c.h.b16 %v43
    %v101 = vunpack.c.l.b16 %v44
    %v102 = vunpack.c.h.b16 %v44
    %v103 = vunpack.c.l.b16 %v45
    %v104 = vunpack.c.h.b16 %v45
    %v105 = vpack.c.b16 %v75, %v73
    %v106 = vpack.c.b16 %v76, %v74
    %v107 = vpack.c.b16 %v79, %v77
    %v108 = vpack.c.b16 %v80, %v78
    %v109 = vpack.c.b16 %v83, %v81
    %v110 = vpack.c.b16 %v84, %v82
    %v111 = vpack.c.b16 %v87, %v85
    %v112 = vpack.c.b16 %v88, %v86
    %v113 = vpack.c.b16 %v91, %v89
    %v114 = vpack.c.b16 %v92, %v90
    %v115 = vpack.c.b16 %v95, %v93
    %v116 = vpack.c.b16 %v96, %v94
    %v117 = vpack.c.b16 %v99, %v97
    %v118 = vpack.c.b16 %v100, %v98
    %v119 = vpack.c.b16 %v103, %v101
    %v120 = vpack.c.b16 %v104, %v102
    %137 = vmatprep.subr.bf16.mxu0 %v106
    %138 = vmatpush1.bf16.msra.mxu0 %v105
    %139 = vmatprep.subr.bf16.mxu0 %v108
    %140 = vmatpush1.bf16.msra.mxu0 %v107
    %141 = vmatprep.subr.bf16.mxu0 %v110
    %142 = vmatpush1.bf16.msra.mxu0 %v109
    %143 = vmatprep.subr.bf16.mxu0 %v112
    %144 = vmatpush1.bf16.msra.mxu0 %v111
    %145 = vmatprep.subr.bf16.mxu0 %v114
    %146 = vmatpush1.bf16.msra.mxu0 %v113
    %147 = vmatprep.subr.bf16.mxu0 %v116
    %148 = vmatpush1.bf16.msra.mxu0 %v115
    %149 = vmatprep.subr.bf16.mxu0 %v118
    %150 = vmatpush1.bf16.msra.mxu0 %v117
    %151 = vmatprep.subr.bf16.mxu0 %v120
    %152 = vmatpush1.bf16.msra.mxu0 %v119
    %153 = vmatprep.subr.bf16.mxu0 0
    %154 = vmatpush1.bf16.msra.mxu0 0
    %155 = vmatprep.subr.bf16.mxu0 0
    %156 = vmatpush1.bf16.msra.mxu0 0
    %157 = vmatprep.subr.bf16.mxu0 0
    %158 = vmatpush1.bf16.msra.mxu0 0
    %159 = vmatprep.subr.bf16.mxu0 0
    %160 = vmatpush1.bf16.msra.mxu0 0
    %161 = vmatprep.subr.bf16.mxu0 0
    %162 = vmatpush1.bf16.msra.mxu0 0
    %163 = vmatprep.subr.bf16.mxu0 0
    %164 = vmatpush1.bf16.msra.mxu0 0
    %165 = vmatprep.subr.bf16.mxu0 0
    %166 = vmatpush1.bf16.msra.mxu0 0
    %167 = vmatprep.subr.bf16.mxu0 0
    %168 = vmatpush1.bf16.msra.mxu0 0
    %169 = vmatprep.mubr.bf16.mxu0 0
    %170 = vmatmul.mubr.bf16.gmra.mrb[0].mxu0 %v29
    %v171 = vpop.f32.mrb[0].mxu0
    %v172 = vadd.f32 %v50, %v171
    %v173 = vpop.f32.mrb[0].mxu0
    %v174 = vadd.f32 %v54, %v173
    %v175 = vpop.f32.mrb[0].mxu0
    %v176 = vpop.f32.mrb[0].mxu0
    %177 = vdwg.mxu0
    %v178 = vmax.f32 %v172, 0.0
    %v179 = vmax.f32 %v174, 0.0
    %v180 = vpack.c.bf16 %v178, %v178
    %v181 = vpack.c.bf16 %v179, %v179
    %v182 = vld [vmem:[%s2] sm:$0xf]
    %v183 = vld [vmem:[%s2 + $0x4] sm:$0xf]
    %v184 = vld [vmem:[%s2 + $0x8] sm:$0xf]
    %v185 = vld [vmem:[%s2 + $0xc] sm:$0xf]
    %v186 = vld [vmem:[%s2 + $0x10] sm:$0xf]
    %v187 = vld [vmem:[%s2 + $0x14] sm:$0xf]
    %v188 = vld [vmem:[%s2 + $0x18] sm:$0xf]
    %v189 = vld [vmem:[%s2 + $0x1c] sm:$0xf]
    %v190 = vld [vmem:[%s2 + $0x20] sm:$0xf]
    %v191 = vld [vmem:[%s2 + $0x24] sm:$0xf]
    %v192 = vld [vmem:[%s2 + $0x28] sm:$0xf]
    %v193 = vld [vmem:[%s2 + $0x2c] sm:$0xf]
    %v194 = vld [vmem:[%s2 + $0x30] sm:$0xf]
    %v195 = vld [vmem:[%s2 + $0x34] sm:$0xf]
    %v196 = vld [vmem:[%s2 + $0x38] sm:$0xf]
    %v197 = vld [vmem:[%s2 + $0x3c] sm:$0xf]
    %v198 = vld [vmem:[%s2 + $0x40] sm:$0xf]
    %v199 = vld [vmem:[%s2 + $0x44] sm:$0xf]
    %v200 = vld [vmem:[%s2 + $0x48] sm:$0xf]
    %v201 = vld [vmem:[%s2 + $0x4c] sm:$0xf]
    %v202 = vld [vmem:[%s2 + $0x50] sm:$0xf]
    %v203 = vld [vmem:[%s2 + $0x54] sm:$0xf]
    %v204 = vld [vmem:[%s2 + $0x58] sm:$0xf]
    %v205 = vld [vmem:[%s2 + $0x5c] sm:$0xf]
    %v206 = vld [vmem:[%s2 + $0x60] sm:$0xf]
    %v207 = vld [vmem:[%s2 + $0x64] sm:$0xf]
    %v208 = vld [vmem:[%s2 + $0x68] sm:$0xf]
    %v209 = vld [vmem:[%s2 + $0x6c] sm:$0xf]
    %v210 = vld [vmem:[%s2 + $0x70] sm:$0xf]
    %v211 = vld [vmem:[%s2 + $0x74] sm:$0xf]
    %v212 = vld [vmem:[%s2 + $0x78] sm:$0xf]
    %v213 = vld [vmem:[%s2 + $0x7c] sm:$0xf]
    %v215 = vlaneseq
    %v216 = vshrl.u32 %v215, 7
    %v217 = vsub.s32 0, %v216
    %v218 = vrot.slane %v26, %v217
    %v252 = vunpack.c.l.b16 %v182
    %v253 = vunpack.c.l.b16 %v183
    %v254 = vunpack.c.l.b16 %v184
    %v255 = vunpack.c.l.b16 %v185
    %v256 = vunpack.c.l.b16 %v186
    %v257 = vunpack.c.l.b16 %v187
    %v258 = vunpack.c.l.b16 %v188
    %v259 = vunpack.c.l.b16 %v189
    %v260 = vunpack.c.l.b16 %v190
    %v261 = vunpack.c.l.b16 %v191
    %v262 = vunpack.c.l.b16 %v192
    %v263 = vunpack.c.l.b16 %v193
    %v264 = vunpack.c.l.b16 %v194
    %v265 = vunpack.c.l.b16 %v195
    %v266 = vunpack.c.l.b16 %v196
    %v267 = vunpack.c.l.b16 %v197
    %v268 = vunpack.c.l.b16 %v198
    %v269 = vunpack.c.l.b16 %v199
    %v270 = vunpack.c.l.b16 %v200
    %v271 = vunpack.c.l.b16 %v201
    %v272 = vunpack.c.l.b16 %v202
    %v273 = vunpack.c.l.b16 %v203
    %v274 = vunpack.c.l.b16 %v204
    %v275 = vunpack.c.l.b16 %v205
    %v276 = vunpack.c.l.b16 %v206
    %v277 = vunpack.c.l.b16 %v207
    %v278 = vunpack.c.l.b16 %v208
    %v279 = vunpack.c.l.b16 %v209
    %v280 = vunpack.c.l.b16 %v210
    %v281 = vunpack.c.l.b16 %v211
    %v282 = vunpack.c.l.b16 %v212
    %v283 = vunpack.c.l.b16 %v213
    %v284 = vpack.c.b16 %v253, %v252
    %v285 = vpack.c.b16 %v255, %v254
    %v286 = vpack.c.b16 %v257, %v256
    %v287 = vpack.c.b16 %v259, %v258
    %v288 = vpack.c.b16 %v261, %v260
    %v289 = vpack.c.b16 %v263, %v262
    %v290 = vpack.c.b16 %v265, %v264
    %v291 = vpack.c.b16 %v267, %v266
    %v292 = vpack.c.b16 %v269, %v268
    %v293 = vpack.c.b16 %v271, %v270
    %v294 = vpack.c.b16 %v273, %v272
    %v295 = vpack.c.b16 %v275, %v274
    %v296 = vpack.c.b16 %v277, %v276
    %v297 = vpack.c.b16 %v279, %v278
    %v298 = vpack.c.b16 %v281, %v280
    %v299 = vpack.c.b16 %v283, %v282
    %316 = vmatprep.subr.bf16.mxu0 0
    %317 = vmatpush1.bf16.msra.mxu0 %v284
    %318 = vmatprep.subr.bf16.mxu0 0
    %319 = vmatpush1.bf16.msra.mxu0 %v285
    %320 = vmatprep.subr.bf16.mxu0 0
    %321 = vmatpush1.bf16.msra.mxu0 %v286
    %322 = vmatprep.subr.bf16.mxu0 0
    %323 = vmatpush1.bf16.msra.mxu0 %v287
    %324 = vmatprep.subr.bf16.mxu0 0
    %325 = vmatpush1.bf16.msra.mxu0 %v288
    %326 = vmatprep.subr.bf16.mxu0 0
    %327 = vmatpush1.bf16.msra.mxu0 %v289
    %328 = vmatprep.subr.bf16.mxu0 0
    %329 = vmatpush1.bf16.msra.mxu0 %v290
    %330 = vmatprep.subr.bf16.mxu0 0
    %331 = vmatpush1.bf16.msra.mxu0 %v291
    %332 = vmatprep.subr.bf16.mxu0 0
    %333 = vmatpush1.bf16.msra.mxu0 %v292
    %334 = vmatprep.subr.bf16.mxu0 0
    %335 = vmatpush1.bf16.msra.mxu0 %v293
    %336 = vmatprep.subr.bf16.mxu0 0
    %337 = vmatpush1.bf16.msra.mxu0 %v294
    %338 = vmatprep.subr.bf16.mxu0 0
    %339 = vmatpush1.bf16.msra.mxu0 %v295
    %340 = vmatprep.subr.bf16.mxu0 0
    %341 = vmatpush1.bf16.msra.mxu0 %v296
    %342 = vmatprep.subr.bf16.mxu0 0
    %343 = vmatpush1.bf16.msra.mxu0 %v297
    %344 = vmatprep.subr.bf16.mxu0 0
    %345 = vmatpush1.bf16.msra.mxu0 %v298
    %346 = vmatprep.subr.bf16.mxu0 0
    %347 = vmatpush1.bf16.msra.mxu0 %v299
    %348 = vmatprep.mubr.bf16.mxu0 %v181
    %349 = vmatmul.mubr.bf16.gmra.mrb[0].mxu0 %v180
    %v350 = vpop.f32.mrb[0].mxu0
    %v351 = vadd.f32 %v218, %v350
    %v352 = vpop.f32.mrb[0].mxu0
    %v353 = vpop.f32.mrb[0].mxu0
    %v354 = vpop.f32.mrb[0].mxu0
    %355 = vdwg.mxu0
    %v356 = vpack.c.bf16 %v351, %v351
    %v357 = vld [vmem:[%s3] sm:$0xff]
    %v358 = vld [vmem:[%s3 + $0x8] sm:$0xff]
    %v359 = vld [vmem:[%s3 + $0x10] sm:$0xff]
    %v360 = vld [vmem:[%s3 + $0x18] sm:$0xff]
    %v361 = vld [vmem:[%s3 + $0x20] sm:$0xff]
    %v362 = vld [vmem:[%s3 + $0x28] sm:$0xff]
    %v363 = vld [vmem:[%s3 + $0x30] sm:$0xff]
    %v364 = vld [vmem:[%s3 + $0x38] sm:$0xff]
    %v365 = vld [vmem:[%s3 + $0x40] sm:$0xff]
    %v366 = vld [vmem:[%s3 + $0x48] sm:$0xff]
    %v367 = vld [vmem:[%s3 + $0x50] sm:$0xff]
    %v368 = vld [vmem:[%s3 + $0x58] sm:$0xff]
    %v369 = vld [vmem:[%s3 + $0x60] sm:$0xff]
    %v370 = vld [vmem:[%s3 + $0x68] sm:$0xff]
    %v371 = vld [vmem:[%s3 + $0x70] sm:$0xff]
    %v372 = vld [vmem:[%s3 + $0x78] sm:$0xff]
    %v374 = vlaneseq
    %v375 = vshrl.u32 %v374, 7
    %v376 = vsub.s32 0, %v375
    %v377 = vrot.slane %v27, %v376
    %v378 = vlaneseq
    %v379 = vshrl.u32 %v378, 7
    %v380 = vsub.s32 1, %v379
    %v381 = vrot.slane %v27, %v380
    %v400 = vunpack.c.l.b16 %v357
    %v401 = vunpack.c.h.b16 %v357
    %v402 = vunpack.c.l.b16 %v358
    %v403 = vunpack.c.h.b16 %v358
    %v404 = vunpack.c.l.b16 %v359
    %v405 = vunpack.c.h.b16 %v359
    %v406 = vunpack.c.l.b16 %v360
    %v407 = vunpack.c.h.b16 %v360
    %v408 = vunpack.c.l.b16 %v361
    %v409 = vunpack.c.h.b16 %v361
    %v410 = vunpack.c.l.b16 %v362
    %v411 = vunpack.c.h.b16 %v362
    %v412 = vunpack.c.l.b16 %v363
    %v413 = vunpack.c.h.b16 %v363
    %v414 = vunpack.c.l.b16 %v364
    %v415 = vunpack.c.h.b16 %v364
    %v416 = vunpack.c.l.b16 %v365
    %v417 = vunpack.c.h.b16 %v365
    %v418 = vunpack.c.l.b16 %v366
    %v419 = vunpack.c.h.b16 %v366
    %v420 = vunpack.c.l.b16 %v367
    %v421 = vunpack.c.h.b16 %v367
    %v422 = vunpack.c.l.b16 %v368
    %v423 = vunpack.c.h.b16 %v368
    %v424 = vunpack.c.l.b16 %v369
    %v425 = vunpack.c.h.b16 %v369
    %v426 = vunpack.c.l.b16 %v370
    %v427 = vunpack.c.h.b16 %v370
    %v428 = vunpack.c.l.b16 %v371
    %v429 = vunpack.c.h.b16 %v371
    %v430 = vunpack.c.l.b16 %v372
    %v431 = vunpack.c.h.b16 %v372
    %v432 = vpack.c.b16 %v402, %v400
    %v433 = vpack.c.b16 %v403, %v401
    %v434 = vpack.c.b16 %v406, %v404
    %v435 = vpack.c.b16 %v407, %v405
    %v436 = vpack.c.b16 %v410, %v408
    %v437 = vpack.c.b16 %v411, %v409
    %v438 = vpack.c.b16 %v414, %v412
    %v439 = vpack.c.b16 %v415, %v413
    %v440 = vpack.c.b16 %v418, %v416
    %v441 = vpack.c.b16 %v419, %v417
    %v442 = vpack.c.b16 %v422, %v420
    %v443 = vpack.c.b16 %v423, %v421
    %v444 = vpack.c.b16 %v426, %v424
    %v445 = vpack.c.b16 %v427, %v425
    %v446 = vpack.c.b16 %v430, %v428
    %v447 = vpack.c.b16 %v431, %v429
    %464 = vmatprep.subr.bf16.mxu0 %v433
    %465 = vmatpush1.bf16.msra.mxu0 %v432
    %466 = vmatprep.subr.bf16.mxu0 %v435
    %467 = vmatpush1.bf16.msra.mxu0 %v434
    %468 = vmatprep.subr.bf16.mxu0 %v437
    %469 = vmatpush1.bf16.msra.mxu0 %v436
    %470 = vmatprep.subr.bf16.mxu0 %v439
    %471 = vmatpush1.bf16.msra.mxu0 %v438
    %472 = vmatprep.subr.bf16.mxu0 %v441
    %473 = vmatpush1.bf16.msra.mxu0 %v440
    %474 = vmatprep.subr.bf16.mxu0 %v443
    %475 = vmatpush1.bf16.msra.mxu0 %v442
    %476 = vmatprep.subr.bf16.mxu0 %v445
    %477 = vmatpush1.bf16.msra.mxu0 %v444
    %478 = vmatprep.subr.bf16.mxu0 %v447
    %479 = vmatpush1.bf16.msra.mxu0 %v446
    %480 = vmatprep.subr.bf16.mxu0 0
    %481 = vmatpush1.bf16.msra.mxu0 0
    %482 = vmatprep.subr.bf16.mxu0 0
    %483 = vmatpush1.bf16.msra.mxu0 0
    %484 = vmatprep.subr.bf16.mxu0 0
    %485 = vmatpush1.bf16.msra.mxu0 0
    %486 = vmatprep.subr.bf16.mxu0 0
    %487 = vmatpush1.bf16.msra.mxu0 0
    %488 = vmatprep.subr.bf16.mxu0 0
    %489 = vmatpush1.bf16.msra.mxu0 0
    %490 = vmatprep.subr.bf16.mxu0 0
    %491 = vmatpush1.bf16.msra.mxu0 0
    %492 = vmatprep.subr.bf16.mxu0 0
    %493 = vmatpush1.bf16.msra.mxu0 0
    %494 = vmatprep.subr.bf16.mxu0 0
    %495 = vmatpush1.bf16.msra.mxu0 0
    %496 = vmatprep.mubr.bf16.mxu0 0
    %497 = vmatmul.mubr.bf16.gmra.mrb[0].mxu0 %v356
    %v498 = vpop.f32.mrb[0].mxu0
    %v499 = vadd.f32 %v377, %v498
    %v500 = vpop.f32.mrb[0].mxu0
    %v501 = vadd.f32 %v381, %v500
    %v502 = vpop.f32.mrb[0].mxu0
    %v503 = vpop.f32.mrb[0].mxu0
    %504 = vdwg.mxu0
    %v505 = vmax.f32 %v499, 0.0
    %v506 = vmax.f32 %v501, 0.0
    %v507 = vpack.c.bf16 %v505, %v505
    %v508 = vpack.c.bf16 %v506, %v506
    %v509 = vld [vmem:[%s4] sm:$0xf]
    %v510 = vld [vmem:[%s4 + $0x4] sm:$0xf]
    %v511 = vld [vmem:[%s4 + $0x8] sm:$0xf]
    %v512 = vld [vmem:[%s4 + $0xc] sm:$0xf]
    %v513 = vld [vmem:[%s4 + $0x10] sm:$0xf]
    %v514 = vld [vmem:[%s4 + $0x14] sm:$0xf]
    %v515 = vld [vmem:[%s4 + $0x18] sm:$0xf]
    %v516 = vld [vmem:[%s4 + $0x1c] sm:$0xf]
    %v517 = vld [vmem:[%s4 + $0x20] sm:$0xf]
    %v518 = vld [vmem:[%s4 + $0x24] sm:$0xf]
    %v519 = vld [vmem:[%s4 + $0x28] sm:$0xf]
    %v520 = vld [vmem:[%s4 + $0x2c] sm:$0xf]
    %v521 = vld [vmem:[%s4 + $0x30] sm:$0xf]
    %v522 = vld [vmem:[%s4 + $0x34] sm:$0xf]
    %v523 = vld [vmem:[%s4 + $0x38] sm:$0xf]
    %v524 = vld [vmem:[%s4 + $0x3c] sm:$0xf]
    %v525 = vld [vmem:[%s4 + $0x40] sm:$0xf]
    %v526 = vld [vmem:[%s4 + $0x44] sm:$0xf]
    %v527 = vld [vmem:[%s4 + $0x48] sm:$0xf]
    %v528 = vld [vmem:[%s4 + $0x4c] sm:$0xf]
    %v529 = vld [vmem:[%s4 + $0x50] sm:$0xf]
    %v530 = vld [vmem:[%s4 + $0x54] sm:$0xf]
    %v531 = vld [vmem:[%s4 + $0x58] sm:$0xf]
    %v532 = vld [vmem:[%s4 + $0x5c] sm:$0xf]
    %v533 = vld [vmem:[%s4 + $0x60] sm:$0xf]
    %v534 = vld [vmem:[%s4 + $0x64] sm:$0xf]
    %v535 = vld [vmem:[%s4 + $0x68] sm:$0xf]
    %v536 = vld [vmem:[%s4 + $0x6c] sm:$0xf]
    %v537 = vld [vmem:[%s4 + $0x70] sm:$0xf]
    %v538 = vld [vmem:[%s4 + $0x74] sm:$0xf]
    %v539 = vld [vmem:[%s4 + $0x78] sm:$0xf]
    %v540 = vld [vmem:[%s4 + $0x7c] sm:$0xf]
    %v542 = vlaneseq
    %v543 = vshrl.u32 %v542, 7
    %v544 = vsub.s32 0, %v543
    %v545 = vrot.slane %v28, %v544
    %v579 = vunpack.c.l.b16 %v509
    %v580 = vunpack.c.l.b16 %v510
    %v581 = vunpack.c.l.b16 %v511
    %v582 = vunpack.c.l.b16 %v512
    %v583 = vunpack.c.l.b16 %v513
    %v584 = vunpack.c.l.b16 %v514
    %v585 = vunpack.c.l.b16 %v515
    %v586 = vunpack.c.l.b16 %v516
    %v587 = vunpack.c.l.b16 %v517
    %v588 = vunpack.c.l.b16 %v518
    %v589 = vunpack.c.l.b16 %v519
    %v590 = vunpack.c.l.b16 %v520
    %v591 = vunpack.c.l.b16 %v521
    %v592 = vunpack.c.l.b16 %v522
    %v593 = vunpack.c.l.b16 %v523
    %v594 = vunpack.c.l.b16 %v524
    %v595 = vunpack.c.l.b16 %v525
    %v596 = vunpack.c.l.b16 %v526
    %v597 = vunpack.c.l.b16 %v527
    %v598 = vunpack.c.l.b16 %v528
    %v599 = vunpack.c.l.b16 %v529
    %v600 = vunpack.c.l.b16 %v530
    %v601 = vunpack.c.l.b16 %v531
    %v602 = vunpack.c.l.b16 %v532
    %v603 = vunpack.c.l.b16 %v533
    %v604 = vunpack.c.l.b16 %v534
    %v605 = vunpack.c.l.b16 %v535
    %v606 = vunpack.c.l.b16 %v536
    %v607 = vunpack.c.l.b16 %v537
    %v608 = vunpack.c.l.b16 %v538
    %v609 = vunpack.c.l.b16 %v539
    %v610 = vunpack.c.l.b16 %v540
    %v611 = vpack.c.b16 %v580, %v579
    %v612 = vpack.c.b16 %v582, %v581
    %v613 = vpack.c.b16 %v584, %v583
    %v614 = vpack.c.b16 %v586, %v585
    %v615 = vpack.c.b16 %v588, %v587
    %v616 = vpack.c.b16 %v590, %v589
    %v617 = vpack.c.b16 %v592, %v591
    %v618 = vpack.c.b16 %v594, %v593
    %v619 = vpack.c.b16 %v596, %v595
    %v620 = vpack.c.b16 %v598, %v597
    %v621 = vpack.c.b16 %v600, %v599
    %v622 = vpack.c.b16 %v602, %v601
    %v623 = vpack.c.b16 %v604, %v603
    %v624 = vpack.c.b16 %v606, %v605
    %v625 = vpack.c.b16 %v608, %v607
    %v626 = vpack.c.b16 %v610, %v609
    %643 = vmatprep.subr.bf16.mxu0 0
    %644 = vmatpush1.bf16.msra.mxu0 %v611
    %645 = vmatprep.subr.bf16.mxu0 0
    %646 = vmatpush1.bf16.msra.mxu0 %v612
    %647 = vmatprep.subr.bf16.mxu0 0
    %648 = vmatpush1.bf16.msra.mxu0 %v613
    %649 = vmatprep.subr.bf16.mxu0 0
    %650 = vmatpush1.bf16.msra.mxu0 %v614
    %651 = vmatprep.subr.bf16.mxu0 0
    %652 = vmatpush1.bf16.msra.mxu0 %v615
    %653 = vmatprep.subr.bf16.mxu0 0
    %654 = vmatpush1.bf16.msra.mxu0 %v616
    %655 = vmatprep.subr.bf16.mxu0 0
    %656 = vmatpush1.bf16.msra.mxu0 %v617
    %657 = vmatprep.subr.bf16.mxu0 0
    %658 = vmatpush1.bf16.msra.mxu0 %v618
    %659 = vmatprep.subr.bf16.mxu0 0
    %660 = vmatpush1.bf16.msra.mxu0 %v619
    %661 = vmatprep.subr.bf16.mxu0 0
    %662 = vmatpush1.bf16.msra.mxu0 %v620
    %663 = vmatprep.subr.bf16.mxu0 0
    %664 = vmatpush1.bf16.msra.mxu0 %v621
    %665 = vmatprep.subr.bf16.mxu0 0
    %666 = vmatpush1.bf16.msra.mxu0 %v622
    %667 = vmatprep.subr.bf16.mxu0 0
    %668 = vmatpush1.bf16.msra.mxu0 %v623
    %669 = vmatprep.subr.bf16.mxu0 0
    %670 = vmatpush1.bf16.msra.mxu0 %v624
    %671 = vmatprep.subr.bf16.mxu0 0
    %672 = vmatpush1.bf16.msra.mxu0 %v625
    %673 = vmatprep.subr.bf16.mxu0 0
    %674 = vmatpush1.bf16.msra.mxu0 %v626
    %675 = vmatprep.mubr.bf16.mxu0 %v508
    %676 = vmatmul.mubr.bf16.gmra.mrb[0].mxu0 %v507
    %v677 = vpop.f32.mrb[0].mxu0
    %v678 = vadd.f32 %v545, %v677
    %v679 = vpop.f32.mrb[0].mxu0
    %v680 = vpop.f32.mrb[0].mxu0
    %v681 = vpop.f32.mrb[0].mxu0
    %682 = vdwg.mxu0
    %683 = vst [vmem:[#allocation2] sm:$0xff] %v678
    // Predicated region
    $region26: #{forward.1} parent=1 // pred_check
      _
    $region27: #{forward.1} parent=1 // pred_check_branch
      %685 = sbr.rel (0) target = $region29
    $region28: #{forward.1} parent=1 // pred_region
      %s687 = ssub.s32 128, 128
      %688 = vsyncadd [#allocation3], %s687
      %s690 = sshll.u32 [#allocation2], 4
      %s691 = int_to_ptr.vmem [resolvable:$true] %s690
      %693 = dma.vmem_to_hbm [thread:$0]  %s691, 128, %s6, [#allocation3]
    $region29: #{forward.1} parent=1 // pred_fallthru
      _
    // Predicated region
    $region30: #{forward.1} parent=1 // pred_check
      _
    $region31: #{forward.1} parent=1 // pred_check_branch
      %695 = sbr.rel (0) target = $region33
    $region32: #{forward.1} parent=1 // pred_region
      %696 = dma.done [#allocation3], 128
    $region33: #{forward.1} parent=1 // pred_fallthru
      _
    %697 = vsyncpa [#allocation3], 1

</llo_original>
